<compile_context>
chip_gen: v6e
topology: v6e:2x2x1
jax: 0.10.0
libtpu: 0.0.40
codegen_flags: <defaults>
</compile_context>

<pallas_src>
import functools

import jax
import jax.numpy as jnp
from jax import lax
from jax.experimental import pallas as pl
from jax.experimental.pallas import tpu as pltpu


def _round_up(x, m):
    return ((x + m - 1) // m) * m


def _layernorm_f32(x, gamma, beta, eps=1e-12):
    mean = jnp.mean(x, axis=-1, keepdims=True)
    c = x - mean
    var = jnp.mean(c * c, axis=-1, keepdims=True)
    y = c * lax.rsqrt(var + eps)
    return y * gamma + beta


# ----------------------------------------------------------------------------
# Fast path: word-embedding table resident in VMEM, rows gathered with dynamic
# sublane indexing.  No DMA machinery, both grid axes parallel.
# ----------------------------------------------------------------------------
def _resident_kernel(ids_ref, we_ref, pos_ref, gamma_ref, beta_ref, out_ref,
                     xbuf, *, pos_resident):
    """ids_ref: (B*S_pad,) int32 in SMEM; we_ref: (V, D) VMEM-resident table;
    pos_ref: (S_pad, D) resident or (t, D) blocked; out_ref/xbuf: (t, D)."""
    t, _ = xbuf.shape
    b = pl.program_id(0)
    s = pl.program_id(1)
    n_s = pl.num_programs(1)
    base = (b * n_s + s) * t

    # Gather t word rows from the resident table into xbuf.
    @pl.loop(0, t, unroll=(t <= 128))
    def _(r):
        tok = ids_ref[base + r]
        xbuf[pl.ds(r, 1), :] = we_ref[pl.ds(tok, 1), :]

    if pos_resident:
        start = pl.multiple_of(s * t, 8)
        pos = pos_ref[pl.ds(start, t), :]
    else:
        pos = pos_ref[...]

    x = xbuf[...].astype(jnp.float32) + pos.astype(jnp.float32)
    y = _layernorm_f32(x, gamma_ref[...].astype(jnp.float32),
                       beta_ref[...].astype(jnp.float32))
    # TODO(synk): nn.Dropout(0.1) is an inference no-op; not applied here.
    out_ref[...] = y.astype(out_ref.dtype)


# ----------------------------------------------------------------------------
# Large-vocab path: word table stays in HBM; per-row DMA gather into a 3-slot
# VMEM buffer, prefetch distance 2, unrolled descriptor-issue loop.
# ----------------------------------------------------------------------------
def _gather_kernel(ids_ref, we_hbm, pos_ref, gamma_ref, beta_ref, out_ref,
                   gbuf, sem, *, pos_resident):
    """ids_ref: (B*S_pad,) int32 in SMEM; we_hbm: (V, D) in HBM (pl.ANY);
    gbuf: (3, t, D) gather slots; sem: (3,) DMA semaphores."""
    n_slots, t, _ = gbuf.shape
    b = pl.program_id(0)
    s = pl.program_id(1)
    n_s = pl.num_programs(1)

    def issue(tile_idx, slot):
        base = (b * n_s + tile_idx) * t
        dst = gbuf.at[slot]

        # Unrolled so descriptor pushes can fill otherwise-idle slots.
        @pl.loop(0, t, unroll=True)
        def _(r):
            tok = ids_ref[base + r]
            pltpu.make_async_copy(
                we_hbm.at[pl.ds(tok, 1), :],
                dst.at[pl.ds(r, 1), :],
                sem.at[slot],
            ).start()

    # Prime a 2-deep prefetch at the start of each batch row's tile sequence.
    # (Megacore-safe: the sequential 's' axis restarts at 0 for every batch
    # index a core executes.)
    @pl.when(s == 0)
    def _():
        issue(0, 0)

    @pl.when(jnp.logical_and(s == 0, s + 1 < n_s))
    def _():
        issue(1, 1)

    # Steady state: keep two tiles in flight.
    @pl.when(s + 2 < n_s)
    def _():
        issue(s + 2, (s + 2) % n_slots)

    # Wait for all row copies of the current tile: every row DMA signalled
    # sem[slot]; one wait descriptor covering the whole (t, D) slot expects the
    # same total byte count (keep both sides byte-symmetric!).
    slot = s % n_slots
    pltpu.make_async_copy(gbuf.at[slot], gbuf.at[slot], sem.at[slot]).wait()

    if pos_resident:
        start = pl.multiple_of(s * t, 8)
        pos = pos_ref[pl.ds(start, t), :]
    else:
        pos = pos_ref[...]

    x = gbuf[slot].astype(jnp.float32) + pos.astype(jnp.float32)
    y = _layernorm_f32(x, gamma_ref[...].astype(jnp.float32),
                       beta_ref[...].astype(jnp.float32))
    # TODO(synk): nn.Dropout(0.1) is an inference no-op; not applied here.
    out_ref[...] = y.astype(out_ref.dtype)


# ----------------------------------------------------------------------------
# Wrapper
# ----------------------------------------------------------------------------
def embeddings_forward(input_ids, word_emb, pos_emb, gamma, beta, *,
                       tile_s=512, out_dtype=None, force_hbm_gather=False):
    """input_ids: (B, S) int; word_emb: (V, D); pos_emb: (n_ctx, D);
    gamma/beta: (D,).  Returns (B, S, D) in out_dtype (defaults to the table
    dtype; pass jnp.bfloat16 to halve writeback traffic)."""
    B, S = input_ids.shape
    V, D = word_emb.shape
    n_ctx = pos_emb.shape[0]
    if out_dtype is None:
        out_dtype = word_emb.dtype

    sz_we = jnp.dtype(word_emb.dtype).itemsize
    sz_pos = jnp.dtype(pos_emb.dtype).itemsize
    sz_out = jnp.dtype(out_dtype).itemsize

    # ---- path selection: VMEM-resident table vs HBM row gather --------------
    table_bytes = V * D * sz_we
    use_resident = (not force_hbm_gather) and (table_bytes <= (8 << 20))

    # ---- tile sizing against a conservative VMEM budget (v7x: 64 MiB phys) --
    VMEM_BUDGET = 44 << 20

    def vmem_need(t_, s_pad_, pos_res_):
        pos_bytes = 2 * (s_pad_ if pos_res_ else t_) * D * sz_pos
        common = pos_bytes + 2 * t_ * D * sz_out + 4 * D * 4  # out dbl-buf + gamma/beta
        if use_resident:
            return common + 2 * table_bytes + t_ * D * sz_we  # table + xbuf
        return common + 3 * t_ * D * sz_we                    # 3 gather slots

    t = max(8, _round_up(min(tile_s, S), 8))
    while True:
        S_pad = _round_up(S, t)
        pos_resident = 2 * S_pad * D * sz_pos <= (12 << 20)
        need = vmem_need(t, S_pad, pos_resident)
        if need <= VMEM_BUDGET or t <= 8:
            break
        t = max(8, _round_up(t // 2, 8))
    n_s = S_pad // t
    vmem_limit = int(min(max(need + (8 << 20), 32 << 20), 56 << 20))

    # Clamp token ids (an out-of-range row access / DMA is an unchecked fault)
    # and pad the sequence with id 0 (padding_idx row).
    ids = jnp.clip(input_ids.astype(jnp.int32), 0, V - 1)
    if S_pad != S:
        ids = jnp.pad(ids, ((0, 0), (0, S_pad - S)))
    ids_flat = ids.reshape(B * S_pad)   # 1-D -> minimal SMEM padding

    # Position table trimmed / zero-padded to exactly S_pad rows.
    # (The torch reference would fail if S > n_ctx; assumed S <= n_ctx upstream.)
    if n_ctx >= S_pad:
        pos = pos_emb[:S_pad]
    else:
        pos = jnp.pad(pos_emb, ((0, S_pad - n_ctx), (0, 0)))

    gamma2 = gamma.reshape(1, D)
    beta2 = beta.reshape(1, D)

    if pos_resident:
        pos_spec = pl.BlockSpec((S_pad, D), lambda b, s, _ids: (0, 0))  # fetched once
    else:
        pos_spec = pl.BlockSpec((t, D), lambda b, s, _ids: (s, 0))
    gb_spec = pl.BlockSpec((1, D), lambda b, s, _ids: (0, 0))
    out_spec = pl.BlockSpec((None, t, D), lambda b, s, _ids: (b, s, 0))

    if use_resident:
        kernel = functools.partial(_resident_kernel, pos_resident=pos_resident)
        in_specs = [pl.BlockSpec((V, D), lambda b, s, _ids: (0, 0)),  # resident table
                    pos_spec, gb_spec, gb_spec]
        scratch = [pltpu.VMEM((t, D), word_emb.dtype)]
        dim_sem = ("parallel", "parallel")
    else:
        kernel = functools.partial(_gather_kernel, pos_resident=pos_resident)
        in_specs = [pl.BlockSpec(memory_space=pl.ANY),                # table in HBM
                    pos_spec, gb_spec, gb_spec]
        scratch = [pltpu.VMEM((3, t, D), word_emb.dtype),             # 3 gather slots
                   pltpu.SemaphoreType.DMA((3,))]
        dim_sem = ("parallel", "arbitrary")   # gather prefetch chains along 's'

    grid_spec = pltpu.PrefetchScalarGridSpec(
        num_scalar_prefetch=1,
        grid=(B, n_s),
        in_specs=in_specs,
        out_specs=out_spec,
        scratch_shapes=scratch,
    )

    cost = pl.CostEstimate(
        flops=10 * B * S_pad * D,
        transcendentals=B * S_pad,
        bytes_accessed=(B * S_pad * D * sz_we        # gathered word rows
                        + S_pad * D * sz_pos         # position rows (read once)
                        + B * S_pad * D * sz_out     # output writeback
                        + B * S_pad * 4),            # token ids
    )

    out = pl.pallas_call(
        kernel,
        out_shape=jax.ShapeDtypeStruct((B, S_pad, D), out_dtype),
        grid_spec=grid_spec,
        compiler_params=pltpu.CompilerParams(
            dimension_semantics=dim_sem,
            vmem_limit_bytes=vmem_limit),
        cost_estimate=cost,
    )(ids_flat, word_emb, pos, gamma2, beta2)

    return out[:, :S, :]


def _reference(input_ids, word_emb, pos_emb, gamma, beta):
    B, S = input_ids.shape
    x = word_emb[input_ids] + pos_emb[jnp.arange(S)][None, :, :]
    mean = jnp.mean(x, axis=-1, keepdims=True)
    var = jnp.mean((x - mean) ** 2, axis=-1, keepdims=True)
    y = (x - mean) / jnp.sqrt(var + 1e-12)
    return y * gamma + beta


if __name__ == "__main__":
    # Small config consistent with the module: d_vocab=64, n_ctx=32, d_model=128.
    d_vocab, n_ctx, d_model = 64, 32, 128
    batch, seq = 2, 32

    key = jax.random.PRNGKey(0)
    k_we, k_pe, k_g, k_b, k_ids = jax.random.split(key, 5)

    # nn.Embedding default init: N(0, 1); padding_idx=0 -> row 0 zeroed.
    word_emb = jax.random.normal(k_we, (d_vocab, d_model), dtype=jnp.float32)
    word_emb = word_emb.at[0].set(0.0)
    pos_emb = jax.random.normal(k_pe, (n_ctx, d_model), dtype=jnp.float32)
    gamma = 1.0 + 0.1 * jax.random.normal(k_g, (d_model,), dtype=jnp.float32)
    beta = 0.1 * jax.random.normal(k_b, (d_model,), dtype=jnp.float32)

    input_ids = jax.random.randint(k_ids, (batch, seq), 0, d_vocab, dtype=jnp.int32)

    ref = _reference(input_ids, word_emb, pos_emb, gamma, beta)

    # 1) Default: small table -> VMEM-resident fast path, one tile per sequence.
    out = jax.block_until_ready(
        embeddings_forward(input_ids, word_emb, pos_emb, gamma, beta))
    assert out.shape == (batch, seq, d_model)
    assert jnp.allclose(out, ref, atol=1e-4, rtol=1e-4)

    # 2) Resident fast path, multi-tile (exercises per-tile pos slicing).
    out2 = jax.block_until_ready(
        embeddings_forward(input_ids, word_emb, pos_emb, gamma, beta, tile_s=8))
    assert jnp.allclose(out2, ref, atol=1e-4, rtol=1e-4)

    # 3) Forced HBM row-gather path: 4 tiles/sequence exercises the 3-slot,
    #    distance-2 prefetch pipeline and the unrolled descriptor-issue loop.
    out3 = jax.block_until_ready(
        embeddings_forward(input_ids, word_emb, pos_emb, gamma, beta,
                           tile_s=8, force_hbm_gather=True))
    assert jnp.allclose(out3, ref, atol=1e-4, rtol=1e-4)

    print("KERNEL_OK")
</pallas_src>

<mosaic_0001>
module attributes {stable_mosaic.version = 11 : i64} {
  func.func @_resident_kernel(%arg0: i32, %arg1: i32, %arg2: memref<64xi32, #tpu.memory_space<smem>>, %arg3: memref<64x128xf32, #tpu.memory_space<vmem>>, %arg4: memref<32x128xf32, #tpu.memory_space<vmem>>, %arg5: memref<1x128xf32, #tpu.memory_space<vmem>>, %arg6: memref<1x128xf32, #tpu.memory_space<vmem>>, %arg7: memref<1x32x128xf32, #tpu.memory_space<vmem>>, %arg8: memref<32x128xf32, #tpu.memory_space<vmem>>) attributes {dimension_semantics = [#tpu.dimension_semantics<parallel>, #tpu.dimension_semantics<parallel>], iteration_bounds = array<i64: 2, 1>, scalar_prefetch = 1 : i64, scratch_operands = 1 : i64, tpu.core_type = #tpu.core_type<tc>, window_params = [{pipeline_mode = #tpu.pipeline_mode<synchronous>, transform_indices = @transform_0, window_bounds = array<i64: 64, 128>}, {pipeline_mode = #tpu.pipeline_mode<synchronous>, transform_indices = @transform_1, window_bounds = array<i64: 32, 128>}, {pipeline_mode = #tpu.pipeline_mode<synchronous>, transform_indices = @transform_2, window_bounds = array<i64: 1, 128>}, {pipeline_mode = #tpu.pipeline_mode<synchronous>, transform_indices = @transform_3, window_bounds = array<i64: 1, 128>}, {transform_indices = @transform_4, window_bounds = array<i64: 1, 32, 128>}]} {
    %c1_i32 = arith.constant 1 : i32
    %0 = arith.muli %arg0, %c1_i32 : i32
    %1 = arith.addi %0, %arg1 : i32
    %c32_i32 = arith.constant 32 : i32
    %2 = arith.muli %1, %c32_i32 : i32
    %c0_i32 = arith.constant 0 : i32
    %c1_i32_0 = arith.constant 1 : i32
    %3 = arith.muli %c0_i32, %c1_i32_0 : i32
    %c0_i32_1 = arith.constant 0 : i32
    %4 = arith.addi %c0_i32_1, %3 : i32
    %5 = arith.addi %2, %4 : i32
    %6 = arith.index_cast %5 : i32 to index
    %7 = memref.load %arg2[%6] : memref<64xi32, #tpu.memory_space<smem>>
    %8 = arith.index_cast %7 : i32 to index
    %c0 = arith.constant 0 : index
    %9 = vector.load %arg3[%8, %c0] : memref<64x128xf32, #tpu.memory_space<vmem>>, vector<1x128xf32>
    %10 = arith.index_cast %4 : i32 to index
    %c0_2 = arith.constant 0 : index
    %11 = vector.load %arg8[%10, %c0_2] : memref<32x128xf32, #tpu.memory_space<vmem>>, vector<1x128xf32>
    tpu.vector_store %arg8[%10, %c0_2], %9 {strides = array<i32>} : memref<32x128xf32, #tpu.memory_space<vmem>>, vector<1x128xf32>,
    %c1_i32_3 = arith.constant 1 : i32
    %c1_i32_4 = arith.constant 1 : i32
    %12 = arith.muli %c1_i32_3, %c1_i32_4 : i32
    %c0_i32_5 = arith.constant 0 : i32
    %13 = arith.addi %c0_i32_5, %12 : i32
    %14 = arith.addi %2, %13 : i32
    %15 = arith.index_cast %14 : i32 to index
    %16 = memref.load %arg2[%15] : memref<64xi32, #tpu.memory_space<smem>>
    %17 = arith.index_cast %16 : i32 to index
    %c0_6 = arith.constant 0 : index
    %18 = vector.load %arg3[%17, %c0_6] : memref<64x128xf32, #tpu.memory_space<vmem>>, vector<1x128xf32>
    %19 = arith.index_cast %13 : i32 to index
    %c0_7 = arith.constant 0 : index
    %20 = vector.load %arg8[%19, %c0_7] : memref<32x128xf32, #tpu.memory_space<vmem>>, vector<1x128xf32>
    tpu.vector_store %arg8[%19, %c0_7], %18 {strides = array<i32>} : memref<32x128xf32, #tpu.memory_space<vmem>>, vector<1x128xf32>,
    %c2_i32 = arith.constant 2 : i32
    %c1_i32_8 = arith.constant 1 : i32
    %21 = arith.muli %c2_i32, %c1_i32_8 : i32
    %c0_i32_9 = arith.constant 0 : i32
    %22 = arith.addi %c0_i32_9, %21 : i32
    %23 = arith.addi %2, %22 : i32
    %24 = arith.index_cast %23 : i32 to index
    %25 = memref.load %arg2[%24] : memref<64xi32, #tpu.memory_space<smem>>
    %26 = arith.index_cast %25 : i32 to index
    %c0_10 = arith.constant 0 : index
    %27 = vector.load %arg3[%26, %c0_10] : memref<64x128xf32, #tpu.memory_space<vmem>>, vector<1x128xf32>
    %28 = arith.index_cast %22 : i32 to index
    %c0_11 = arith.constant 0 : index
    %29 = vector.load %arg8[%28, %c0_11] : memref<32x128xf32, #tpu.memory_space<vmem>>, vector<1x128xf32>
    tpu.vector_store %arg8[%28, %c0_11], %27 {strides = array<i32>} : memref<32x128xf32, #tpu.memory_space<vmem>>, vector<1x128xf32>,
    %c3_i32 = arith.constant 3 : i32
    %c1_i32_12 = arith.constant 1 : i32
    %30 = arith.muli %c3_i32, %c1_i32_12 : i32
    %c0_i32_13 = arith.constant 0 : i32
    %31 = arith.addi %c0_i32_13, %30 : i32
    %32 = arith.addi %2, %31 : i32
    %33 = arith.index_cast %32 : i32 to index
    %34 = memref.load %arg2[%33] : memref<64xi32, #tpu.memory_space<smem>>
    %35 = arith.index_cast %34 : i32 to index
    %c0_14 = arith.constant 0 : index
    %36 = vector.load %arg3[%35, %c0_14] : memref<64x128xf32, #tpu.memory_space<vmem>>, vector<1x128xf32>
    %37 = arith.index_cast %31 : i32 to index
    %c0_15 = arith.constant 0 : index
    %38 = vector.load %arg8[%37, %c0_15] : memref<32x128xf32, #tpu.memory_space<vmem>>, vector<1x128xf32>
    tpu.vector_store %arg8[%37, %c0_15], %36 {strides = array<i32>} : memref<32x128xf32, #tpu.memory_space<vmem>>, vector<1x128xf32>,
    %c4_i32 = arith.constant 4 : i32
    %c1_i32_16 = arith.constant 1 : i32
    %39 = arith.muli %c4_i32, %c1_i32_16 : i32
    %c0_i32_17 = arith.constant 0 : i32
    %40 = arith.addi %c0_i32_17, %39 : i32
    %41 = arith.addi %2, %40 : i32
    %42 = arith.index_cast %41 : i32 to index
    %43 = memref.load %arg2[%42] : memref<64xi32, #tpu.memory_space<smem>>
    %44 = arith.index_cast %43 : i32 to index
    %c0_18 = arith.constant 0 : index
    %45 = vector.load %arg3[%44, %c0_18] : memref<64x128xf32, #tpu.memory_space<vmem>>, vector<1x128xf32>
    %46 = arith.index_cast %40 : i32 to index
    %c0_19 = arith.constant 0 : index
    %47 = vector.load %arg8[%46, %c0_19] : memref<32x128xf32, #tpu.memory_space<vmem>>, vector<1x128xf32>
    tpu.vector_store %arg8[%46, %c0_19], %45 {strides = array<i32>} : memref<32x128xf32, #tpu.memory_space<vmem>>, vector<1x128xf32>,
    %c5_i32 = arith.constant 5 : i32
    %c1_i32_20 = arith.constant 1 : i32
    %48 = arith.muli %c5_i32, %c1_i32_20 : i32
    %c0_i32_21 = arith.constant 0 : i32
    %49 = arith.addi %c0_i32_21, %48 : i32
    %50 = arith.addi %2, %49 : i32
    %51 = arith.index_cast %50 : i32 to index
    %52 = memref.load %arg2[%51] : memref<64xi32, #tpu.memory_space<smem>>
    %53 = arith.index_cast %52 : i32 to index
    %c0_22 = arith.constant 0 : index
    %54 = vector.load %arg3[%53, %c0_22] : memref<64x128xf32, #tpu.memory_space<vmem>>, vector<1x128xf32>
    %55 = arith.index_cast %49 : i32 to index
    %c0_23 = arith.constant 0 : index
    %56 = vector.load %arg8[%55, %c0_23] : memref<32x128xf32, #tpu.memory_space<vmem>>, vector<1x128xf32>
    tpu.vector_store %arg8[%55, %c0_23], %54 {strides = array<i32>} : memref<32x128xf32, #tpu.memory_space<vmem>>, vector<1x128xf32>,
    %c6_i32 = arith.constant 6 : i32
    %c1_i32_24 = arith.constant 1 : i32
    %57 = arith.muli %c6_i32, %c1_i32_24 : i32
    %c0_i32_25 = arith.constant 0 : i32
    %58 = arith.addi %c0_i32_25, %57 : i32
    %59 = arith.addi %2, %58 : i32
    %60 = arith.index_cast %59 : i32 to index
    %61 = memref.load %arg2[%60] : memref<64xi32, #tpu.memory_space<smem>>
    %62 = arith.index_cast %61 : i32 to index
    %c0_26 = arith.constant 0 : index
    %63 = vector.load %arg3[%62, %c0_26] : memref<64x128xf32, #tpu.memory_space<vmem>>, vector<1x128xf32>
    %64 = arith.index_cast %58 : i32 to index
    %c0_27 = arith.constant 0 : index
    %65 = vector.load %arg8[%64, %c0_27] : memref<32x128xf32, #tpu.memory_space<vmem>>, vector<1x128xf32>
    tpu.vector_store %arg8[%64, %c0_27], %63 {strides = array<i32>} : memref<32x128xf32, #tpu.memory_space<vmem>>, vector<1x128xf32>,
    %c7_i32 = arith.constant 7 : i32
    %c1_i32_28 = arith.constant 1 : i32
    %66 = arith.muli %c7_i32, %c1_i32_28 : i32
    %c0_i32_29 = arith.constant 0 : i32
    %67 = arith.addi %c0_i32_29, %66 : i32
    %68 = arith.addi %2, %67 : i32
    %69 = arith.index_cast %68 : i32 to index
    %70 = memref.load %arg2[%69] : memref<64xi32, #tpu.memory_space<smem>>
    %71 = arith.index_cast %70 : i32 to index
    %c0_30 = arith.constant 0 : index
    %72 = vector.load %arg3[%71, %c0_30] : memref<64x128xf32, #tpu.memory_space<vmem>>, vector<1x128xf32>
    %73 = arith.index_cast %67 : i32 to index
    %c0_31 = arith.constant 0 : index
    %74 = vector.load %arg8[%73, %c0_31] : memref<32x128xf32, #tpu.memory_space<vmem>>, vector<1x128xf32>
    tpu.vector_store %arg8[%73, %c0_31], %72 {strides = array<i32>} : memref<32x128xf32, #tpu.memory_space<vmem>>, vector<1x128xf32>,
    %c8_i32 = arith.constant 8 : i32
    %c1_i32_32 = arith.constant 1 : i32
    %75 = arith.muli %c8_i32, %c1_i32_32 : i32
    %c0_i32_33 = arith.constant 0 : i32
    %76 = arith.addi %c0_i32_33, %75 : i32
    %77 = arith.addi %2, %76 : i32
    %78 = arith.index_cast %77 : i32 to index
    %79 = memref.load %arg2[%78] : memref<64xi32, #tpu.memory_space<smem>>
    %80 = arith.index_cast %79 : i32 to index
    %c0_34 = arith.constant 0 : index
    %81 = vector.load %arg3[%80, %c0_34] : memref<64x128xf32, #tpu.memory_space<vmem>>, vector<1x128xf32>
    %82 = arith.index_cast %76 : i32 to index
    %c0_35 = arith.constant 0 : index
    %83 = vector.load %arg8[%82, %c0_35] : memref<32x128xf32, #tpu.memory_space<vmem>>, vector<1x128xf32>
    tpu.vector_store %arg8[%82, %c0_35], %81 {strides = array<i32>} : memref<32x128xf32, #tpu.memory_space<vmem>>, vector<1x128xf32>,
    %c9_i32 = arith.constant 9 : i32
    %c1_i32_36 = arith.constant 1 : i32
    %84 = arith.muli %c9_i32, %c1_i32_36 : i32
    %c0_i32_37 = arith.constant 0 : i32
    %85 = arith.addi %c0_i32_37, %84 : i32
    %86 = arith.addi %2, %85 : i32
    %87 = arith.index_cast %86 : i32 to index
    %88 = memref.load %arg2[%87] : memref<64xi32, #tpu.memory_space<smem>>
    %89 = arith.index_cast %88 : i32 to index
    %c0_38 = arith.constant 0 : index
    %90 = vector.load %arg3[%89, %c0_38] : memref<64x128xf32, #tpu.memory_space<vmem>>, vector<1x128xf32>
    %91 = arith.index_cast %85 : i32 to index
    %c0_39 = arith.constant 0 : index
    %92 = vector.load %arg8[%91, %c0_39] : memref<32x128xf32, #tpu.memory_space<vmem>>, vector<1x128xf32>
    tpu.vector_store %arg8[%91, %c0_39], %90 {strides = array<i32>} : memref<32x128xf32, #tpu.memory_space<vmem>>, vector<1x128xf32>,
    %c10_i32 = arith.constant 10 : i32
    %c1_i32_40 = arith.constant 1 : i32
    %93 = arith.muli %c10_i32, %c1_i32_40 : i32
    %c0_i32_41 = arith.constant 0 : i32
    %94 = arith.addi %c0_i32_41, %93 : i32
    %95 = arith.addi %2, %94 : i32
    %96 = arith.index_cast %95 : i32 to index
    %97 = memref.load %arg2[%96] : memref<64xi32, #tpu.memory_space<smem>>
    %98 = arith.index_cast %97 : i32 to index
    %c0_42 = arith.constant 0 : index
    %99 = vector.load %arg3[%98, %c0_42] : memref<64x128xf32, #tpu.memory_space<vmem>>, vector<1x128xf32>
    %100 = arith.index_cast %94 : i32 to index
    %c0_43 = arith.constant 0 : index
    %101 = vector.load %arg8[%100, %c0_43] : memref<32x128xf32, #tpu.memory_space<vmem>>, vector<1x128xf32>
    tpu.vector_store %arg8[%100, %c0_43], %99 {strides = array<i32>} : memref<32x128xf32, #tpu.memory_space<vmem>>, vector<1x128xf32>,
    %c11_i32 = arith.constant 11 : i32
    %c1_i32_44 = arith.constant 1 : i32
    %102 = arith.muli %c11_i32, %c1_i32_44 : i32
    %c0_i32_45 = arith.constant 0 : i32
    %103 = arith.addi %c0_i32_45, %102 : i32
    %104 = arith.addi %2, %103 : i32
    %105 = arith.index_cast %104 : i32 to index
    %106 = memref.load %arg2[%105] : memref<64xi32, #tpu.memory_space<smem>>
    %107 = arith.index_cast %106 : i32 to index
    %c0_46 = arith.constant 0 : index
    %108 = vector.load %arg3[%107, %c0_46] : memref<64x128xf32, #tpu.memory_space<vmem>>, vector<1x128xf32>
    %109 = arith.index_cast %103 : i32 to index
    %c0_47 = arith.constant 0 : index
    %110 = vector.load %arg8[%109, %c0_47] : memref<32x128xf32, #tpu.memory_space<vmem>>, vector<1x128xf32>
    tpu.vector_store %arg8[%109, %c0_47], %108 {strides = array<i32>} : memref<32x128xf32, #tpu.memory_space<vmem>>, vector<1x128xf32>,
    %c12_i32 = arith.constant 12 : i32
    %c1_i32_48 = arith.constant 1 : i32
    %111 = arith.muli %c12_i32, %c1_i32_48 : i32
    %c0_i32_49 = arith.constant 0 : i32
    %112 = arith.addi %c0_i32_49, %111 : i32
    %113 = arith.addi %2, %112 : i32
    %114 = arith.index_cast %113 : i32 to index
    %115 = memref.load %arg2[%114] : memref<64xi32, #tpu.memory_space<smem>>
    %116 = arith.index_cast %115 : i32 to index
    %c0_50 = arith.constant 0 : index
    %117 = vector.load %arg3[%116, %c0_50] : memref<64x128xf32, #tpu.memory_space<vmem>>, vector<1x128xf32>
    %118 = arith.index_cast %112 : i32 to index
    %c0_51 = arith.constant 0 : index
    %119 = vector.load %arg8[%118, %c0_51] : memref<32x128xf32, #tpu.memory_space<vmem>>, vector<1x128xf32>
    tpu.vector_store %arg8[%118, %c0_51], %117 {strides = array<i32>} : memref<32x128xf32, #tpu.memory_space<vmem>>, vector<1x128xf32>,
    %c13_i32 = arith.constant 13 : i32
    %c1_i32_52 = arith.constant 1 : i32
    %120 = arith.muli %c13_i32, %c1_i32_52 : i32
    %c0_i32_53 = arith.constant 0 : i32
    %121 = arith.addi %c0_i32_53, %120 : i32
    %122 = arith.addi %2, %121 : i32
    %123 = arith.index_cast %122 : i32 to index
    %124 = memref.load %arg2[%123] : memref<64xi32, #tpu.memory_space<smem>>
    %125 = arith.index_cast %124 : i32 to index
    %c0_54 = arith.constant 0 : index
    %126 = vector.load %arg3[%125, %c0_54] : memref<64x128xf32, #tpu.memory_space<vmem>>, vector<1x128xf32>
    %127 = arith.index_cast %121 : i32 to index
    %c0_55 = arith.constant 0 : index
    %128 = vector.load %arg8[%127, %c0_55] : memref<32x128xf32, #tpu.memory_space<vmem>>, vector<1x128xf32>
    tpu.vector_store %arg8[%127, %c0_55], %126 {strides = array<i32>} : memref<32x128xf32, #tpu.memory_space<vmem>>, vector<1x128xf32>,
    %c14_i32 = arith.constant 14 : i32
    %c1_i32_56 = arith.constant 1 : i32
    %129 = arith.muli %c14_i32, %c1_i32_56 : i32
    %c0_i32_57 = arith.constant 0 : i32
    %130 = arith.addi %c0_i32_57, %129 : i32
    %131 = arith.addi %2, %130 : i32
    %132 = arith.index_cast %131 : i32 to index
    %133 = memref.load %arg2[%132] : memref<64xi32, #tpu.memory_space<smem>>
    %134 = arith.index_cast %133 : i32 to index
    %c0_58 = arith.constant 0 : index
    %135 = vector.load %arg3[%134, %c0_58] : memref<64x128xf32, #tpu.memory_space<vmem>>, vector<1x128xf32>
    %136 = arith.index_cast %130 : i32 to index
    %c0_59 = arith.constant 0 : index
    %137 = vector.load %arg8[%136, %c0_59] : memref<32x128xf32, #tpu.memory_space<vmem>>, vector<1x128xf32>
    tpu.vector_store %arg8[%136, %c0_59], %135 {strides = array<i32>} : memref<32x128xf32, #tpu.memory_space<vmem>>, vector<1x128xf32>,
    %c15_i32 = arith.constant 15 : i32
    %c1_i32_60 = arith.constant 1 : i32
    %138 = arith.muli %c15_i32, %c1_i32_60 : i32
    %c0_i32_61 = arith.constant 0 : i32
    %139 = arith.addi %c0_i32_61, %138 : i32
    %140 = arith.addi %2, %139 : i32
    %141 = arith.index_cast %140 : i32 to index
    %142 = memref.load %arg2[%141] : memref<64xi32, #tpu.memory_space<smem>>
    %143 = arith.index_cast %142 : i32 to index
    %c0_62 = arith.constant 0 : index
    %144 = vector.load %arg3[%143, %c0_62] : memref<64x128xf32, #tpu.memory_space<vmem>>, vector<1x128xf32>
    %145 = arith.index_cast %139 : i32 to index
    %c0_63 = arith.constant 0 : index
    %146 = vector.load %arg8[%145, %c0_63] : memref<32x128xf32, #tpu.memory_space<vmem>>, vector<1x128xf32>
    tpu.vector_store %arg8[%145, %c0_63], %144 {strides = array<i32>} : memref<32x128xf32, #tpu.memory_space<vmem>>, vector<1x128xf32>,
    %c16_i32 = arith.constant 16 : i32
    %c1_i32_64 = arith.constant 1 : i32
    %147 = arith.muli %c16_i32, %c1_i32_64 : i32
    %c0_i32_65 = arith.constant 0 : i32
    %148 = arith.addi %c0_i32_65, %147 : i32
    %149 = arith.addi %2, %148 : i32
    %150 = arith.index_cast %149 : i32 to index
    %151 = memref.load %arg2[%150] : memref<64xi32, #tpu.memory_space<smem>>
    %152 = arith.index_cast %151 : i32 to index
    %c0_66 = arith.constant 0 : index
    %153 = vector.load %arg3[%152, %c0_66] : memref<64x128xf32, #tpu.memory_space<vmem>>, vector<1x128xf32>
    %154 = arith.index_cast %148 : i32 to index
    %c0_67 = arith.constant 0 : index
    %155 = vector.load %arg8[%154, %c0_67] : memref<32x128xf32, #tpu.memory_space<vmem>>, vector<1x128xf32>
    tpu.vector_store %arg8[%154, %c0_67], %153 {strides = array<i32>} : memref<32x128xf32, #tpu.memory_space<vmem>>, vector<1x128xf32>,
    %c17_i32 = arith.constant 17 : i32
    %c1_i32_68 = arith.constant 1 : i32
    %156 = arith.muli %c17_i32, %c1_i32_68 : i32
    %c0_i32_69 = arith.constant 0 : i32
    %157 = arith.addi %c0_i32_69, %156 : i32
    %158 = arith.addi %2, %157 : i32
    %159 = arith.index_cast %158 : i32 to index
    %160 = memref.load %arg2[%159] : memref<64xi32, #tpu.memory_space<smem>>
    %161 = arith.index_cast %160 : i32 to index
    %c0_70 = arith.constant 0 : index
    %162 = vector.load %arg3[%161, %c0_70] : memref<64x128xf32, #tpu.memory_space<vmem>>, vector<1x128xf32>
    %163 = arith.index_cast %157 : i32 to index
    %c0_71 = arith.constant 0 : index
    %164 = vector.load %arg8[%163, %c0_71] : memref<32x128xf32, #tpu.memory_space<vmem>>, vector<1x128xf32>
    tpu.vector_store %arg8[%163, %c0_71], %162 {strides = array<i32>} : memref<32x128xf32, #tpu.memory_space<vmem>>, vector<1x128xf32>,
    %c18_i32 = arith.constant 18 : i32
    %c1_i32_72 = arith.constant 1 : i32
    %165 = arith.muli %c18_i32, %c1_i32_72 : i32
    %c0_i32_73 = arith.constant 0 : i32
    %166 = arith.addi %c0_i32_73, %165 : i32
    %167 = arith.addi %2, %166 : i32
    %168 = arith.index_cast %167 : i32 to index
    %169 = memref.load %arg2[%168] : memref<64xi32, #tpu.memory_space<smem>>
    %170 = arith.index_cast %169 : i32 to index
    %c0_74 = arith.constant 0 : index
    %171 = vector.load %arg3[%170, %c0_74] : memref<64x128xf32, #tpu.memory_space<vmem>>, vector<1x128xf32>
    %172 = arith.index_cast %166 : i32 to index
    %c0_75 = arith.constant 0 : index
    %173 = vector.load %arg8[%172, %c0_75] : memref<32x128xf32, #tpu.memory_space<vmem>>, vector<1x128xf32>
    tpu.vector_store %arg8[%172, %c0_75], %171 {strides = array<i32>} : memref<32x128xf32, #tpu.memory_space<vmem>>, vector<1x128xf32>,
    %c19_i32 = arith.constant 19 : i32
    %c1_i32_76 = arith.constant 1 : i32
    %174 = arith.muli %c19_i32, %c1_i32_76 : i32
    %c0_i32_77 = arith.constant 0 : i32
    %175 = arith.addi %c0_i32_77, %174 : i32
    %176 = arith.addi %2, %175 : i32
    %177 = arith.index_cast %176 : i32 to index
    %178 = memref.load %arg2[%177] : memref<64xi32, #tpu.memory_space<smem>>
    %179 = arith.index_cast %178 : i32 to index
    %c0_78 = arith.constant 0 : index
    %180 = vector.load %arg3[%179, %c0_78] : memref<64x128xf32, #tpu.memory_space<vmem>>, vector<1x128xf32>
    %181 = arith.index_cast %175 : i32 to index
    %c0_79 = arith.constant 0 : index
    %182 = vector.load %arg8[%181, %c0_79] : memref<32x128xf32, #tpu.memory_space<vmem>>, vector<1x128xf32>
    tpu.vector_store %arg8[%181, %c0_79], %180 {strides = array<i32>} : memref<32x128xf32, #tpu.memory_space<vmem>>, vector<1x128xf32>,
    %c20_i32 = arith.constant 20 : i32
    %c1_i32_80 = arith.constant 1 : i32
    %183 = arith.muli %c20_i32, %c1_i32_80 : i32
    %c0_i32_81 = arith.constant 0 : i32
    %184 = arith.addi %c0_i32_81, %183 : i32
    %185 = arith.addi %2, %184 : i32
    %186 = arith.index_cast %185 : i32 to index
    %187 = memref.load %arg2[%186] : memref<64xi32, #tpu.memory_space<smem>>
    %188 = arith.index_cast %187 : i32 to index
    %c0_82 = arith.constant 0 : index
    %189 = vector.load %arg3[%188, %c0_82] : memref<64x128xf32, #tpu.memory_space<vmem>>, vector<1x128xf32>
    %190 = arith.index_cast %184 : i32 to index
    %c0_83 = arith.constant 0 : index
    %191 = vector.load %arg8[%190, %c0_83] : memref<32x128xf32, #tpu.memory_space<vmem>>, vector<1x128xf32>
    tpu.vector_store %arg8[%190, %c0_83], %189 {strides = array<i32>} : memref<32x128xf32, #tpu.memory_space<vmem>>, vector<1x128xf32>,
    %c21_i32 = arith.constant 21 : i32
    %c1_i32_84 = arith.constant 1 : i32
    %192 = arith.muli %c21_i32, %c1_i32_84 : i32
    %c0_i32_85 = arith.constant 0 : i32
    %193 = arith.addi %c0_i32_85, %192 : i32
    %194 = arith.addi %2, %193 : i32
    %195 = arith.index_cast %194 : i32 to index
    %196 = memref.load %arg2[%195] : memref<64xi32, #tpu.memory_space<smem>>
    %197 = arith.index_cast %196 : i32 to index
    %c0_86 = arith.constant 0 : index
    %198 = vector.load %arg3[%197, %c0_86] : memref<64x128xf32, #tpu.memory_space<vmem>>, vector<1x128xf32>
    %199 = arith.index_cast %193 : i32 to index
    %c0_87 = arith.constant 0 : index
    %200 = vector.load %arg8[%199, %c0_87] : memref<32x128xf32, #tpu.memory_space<vmem>>, vector<1x128xf32>
    tpu.vector_store %arg8[%199, %c0_87], %198 {strides = array<i32>} : memref<32x128xf32, #tpu.memory_space<vmem>>, vector<1x128xf32>,
    %c22_i32 = arith.constant 22 : i32
    %c1_i32_88 = arith.constant 1 : i32
    %201 = arith.muli %c22_i32, %c1_i32_88 : i32
    %c0_i32_89 = arith.constant 0 : i32
    %202 = arith.addi %c0_i32_89, %201 : i32
    %203 = arith.addi %2, %202 : i32
    %204 = arith.index_cast %203 : i32 to index
    %205 = memref.load %arg2[%204] : memref<64xi32, #tpu.memory_space<smem>>
    %206 = arith.index_cast %205 : i32 to index
    %c0_90 = arith.constant 0 : index
    %207 = vector.load %arg3[%206, %c0_90] : memref<64x128xf32, #tpu.memory_space<vmem>>, vector<1x128xf32>
    %208 = arith.index_cast %202 : i32 to index
    %c0_91 = arith.constant 0 : index
    %209 = vector.load %arg8[%208, %c0_91] : memref<32x128xf32, #tpu.memory_space<vmem>>, vector<1x128xf32>
    tpu.vector_store %arg8[%208, %c0_91], %207 {strides = array<i32>} : memref<32x128xf32, #tpu.memory_space<vmem>>, vector<1x128xf32>,
    %c23_i32 = arith.constant 23 : i32
    %c1_i32_92 = arith.constant 1 : i32
    %210 = arith.muli %c23_i32, %c1_i32_92 : i32
    %c0_i32_93 = arith.constant 0 : i32
    %211 = arith.addi %c0_i32_93, %210 : i32
    %212 = arith.addi %2, %211 : i32
    %213 = arith.index_cast %212 : i32 to index
    %214 = memref.load %arg2[%213] : memref<64xi32, #tpu.memory_space<smem>>
    %215 = arith.index_cast %214 : i32 to index
    %c0_94 = arith.constant 0 : index
    %216 = vector.load %arg3[%215, %c0_94] : memref<64x128xf32, #tpu.memory_space<vmem>>, vector<1x128xf32>
    %217 = arith.index_cast %211 : i32 to index
    %c0_95 = arith.constant 0 : index
    %218 = vector.load %arg8[%217, %c0_95] : memref<32x128xf32, #tpu.memory_space<vmem>>, vector<1x128xf32>
    tpu.vector_store %arg8[%217, %c0_95], %216 {strides = array<i32>} : memref<32x128xf32, #tpu.memory_space<vmem>>, vector<1x128xf32>,
    %c24_i32 = arith.constant 24 : i32
    %c1_i32_96 = arith.constant 1 : i32
    %219 = arith.muli %c24_i32, %c1_i32_96 : i32
    %c0_i32_97 = arith.constant 0 : i32
    %220 = arith.addi %c0_i32_97, %219 : i32
    %221 = arith.addi %2, %220 : i32
    %222 = arith.index_cast %221 : i32 to index
    %223 = memref.load %arg2[%222] : memref<64xi32, #tpu.memory_space<smem>>
    %224 = arith.index_cast %223 : i32 to index
    %c0_98 = arith.constant 0 : index
    %225 = vector.load %arg3[%224, %c0_98] : memref<64x128xf32, #tpu.memory_space<vmem>>, vector<1x128xf32>
    %226 = arith.index_cast %220 : i32 to index
    %c0_99 = arith.constant 0 : index
    %227 = vector.load %arg8[%226, %c0_99] : memref<32x128xf32, #tpu.memory_space<vmem>>, vector<1x128xf32>
    tpu.vector_store %arg8[%226, %c0_99], %225 {strides = array<i32>} : memref<32x128xf32, #tpu.memory_space<vmem>>, vector<1x128xf32>,
    %c25_i32 = arith.constant 25 : i32
    %c1_i32_100 = arith.constant 1 : i32
    %228 = arith.muli %c25_i32, %c1_i32_100 : i32
    %c0_i32_101 = arith.constant 0 : i32
    %229 = arith.addi %c0_i32_101, %228 : i32
    %230 = arith.addi %2, %229 : i32
    %231 = arith.index_cast %230 : i32 to index
    %232 = memref.load %arg2[%231] : memref<64xi32, #tpu.memory_space<smem>>
    %233 = arith.index_cast %232 : i32 to index
    %c0_102 = arith.constant 0 : index
    %234 = vector.load %arg3[%233, %c0_102] : memref<64x128xf32, #tpu.memory_space<vmem>>, vector<1x128xf32>
    %235 = arith.index_cast %229 : i32 to index
    %c0_103 = arith.constant 0 : index
    %236 = vector.load %arg8[%235, %c0_103] : memref<32x128xf32, #tpu.memory_space<vmem>>, vector<1x128xf32>
    tpu.vector_store %arg8[%235, %c0_103], %234 {strides = array<i32>} : memref<32x128xf32, #tpu.memory_space<vmem>>, vector<1x128xf32>,
    %c26_i32 = arith.constant 26 : i32
    %c1_i32_104 = arith.constant 1 : i32
    %237 = arith.muli %c26_i32, %c1_i32_104 : i32
    %c0_i32_105 = arith.constant 0 : i32
    %238 = arith.addi %c0_i32_105, %237 : i32
    %239 = arith.addi %2, %238 : i32
    %240 = arith.index_cast %239 : i32 to index
    %241 = memref.load %arg2[%240] : memref<64xi32, #tpu.memory_space<smem>>
    %242 = arith.index_cast %241 : i32 to index
    %c0_106 = arith.constant 0 : index
    %243 = vector.load %arg3[%242, %c0_106] : memref<64x128xf32, #tpu.memory_space<vmem>>, vector<1x128xf32>
    %244 = arith.index_cast %238 : i32 to index
    %c0_107 = arith.constant 0 : index
    %245 = vector.load %arg8[%244, %c0_107] : memref<32x128xf32, #tpu.memory_space<vmem>>, vector<1x128xf32>
    tpu.vector_store %arg8[%244, %c0_107], %243 {strides = array<i32>} : memref<32x128xf32, #tpu.memory_space<vmem>>, vector<1x128xf32>,
    %c27_i32 = arith.constant 27 : i32
    %c1_i32_108 = arith.constant 1 : i32
    %246 = arith.muli %c27_i32, %c1_i32_108 : i32
    %c0_i32_109 = arith.constant 0 : i32
    %247 = arith.addi %c0_i32_109, %246 : i32
    %248 = arith.addi %2, %247 : i32
    %249 = arith.index_cast %248 : i32 to index
    %250 = memref.load %arg2[%249] : memref<64xi32, #tpu.memory_space<smem>>
    %251 = arith.index_cast %250 : i32 to index
    %c0_110 = arith.constant 0 : index
    %252 = vector.load %arg3[%251, %c0_110] : memref<64x128xf32, #tpu.memory_space<vmem>>, vector<1x128xf32>
    %253 = arith.index_cast %247 : i32 to index
    %c0_111 = arith.constant 0 : index
    %254 = vector.load %arg8[%253, %c0_111] : memref<32x128xf32, #tpu.memory_space<vmem>>, vector<1x128xf32>
    tpu.vector_store %arg8[%253, %c0_111], %252 {strides = array<i32>} : memref<32x128xf32, #tpu.memory_space<vmem>>, vector<1x128xf32>,
    %c28_i32 = arith.constant 28 : i32
    %c1_i32_112 = arith.constant 1 : i32
    %255 = arith.muli %c28_i32, %c1_i32_112 : i32
    %c0_i32_113 = arith.constant 0 : i32
    %256 = arith.addi %c0_i32_113, %255 : i32
    %257 = arith.addi %2, %256 : i32
    %258 = arith.index_cast %257 : i32 to index
    %259 = memref.load %arg2[%258] : memref<64xi32, #tpu.memory_space<smem>>
    %260 = arith.index_cast %259 : i32 to index
    %c0_114 = arith.constant 0 : index
    %261 = vector.load %arg3[%260, %c0_114] : memref<64x128xf32, #tpu.memory_space<vmem>>, vector<1x128xf32>
    %262 = arith.index_cast %256 : i32 to index
    %c0_115 = arith.constant 0 : index
    %263 = vector.load %arg8[%262, %c0_115] : memref<32x128xf32, #tpu.memory_space<vmem>>, vector<1x128xf32>
    tpu.vector_store %arg8[%262, %c0_115], %261 {strides = array<i32>} : memref<32x128xf32, #tpu.memory_space<vmem>>, vector<1x128xf32>,
    %c29_i32 = arith.constant 29 : i32
    %c1_i32_116 = arith.constant 1 : i32
    %264 = arith.muli %c29_i32, %c1_i32_116 : i32
    %c0_i32_117 = arith.constant 0 : i32
    %265 = arith.addi %c0_i32_117, %264 : i32
    %266 = arith.addi %2, %265 : i32
    %267 = arith.index_cast %266 : i32 to index
    %268 = memref.load %arg2[%267] : memref<64xi32, #tpu.memory_space<smem>>
    %269 = arith.index_cast %268 : i32 to index
    %c0_118 = arith.constant 0 : index
    %270 = vector.load %arg3[%269, %c0_118] : memref<64x128xf32, #tpu.memory_space<vmem>>, vector<1x128xf32>
    %271 = arith.index_cast %265 : i32 to index
    %c0_119 = arith.constant 0 : index
    %272 = vector.load %arg8[%271, %c0_119] : memref<32x128xf32, #tpu.memory_space<vmem>>, vector<1x128xf32>
    tpu.vector_store %arg8[%271, %c0_119], %270 {strides = array<i32>} : memref<32x128xf32, #tpu.memory_space<vmem>>, vector<1x128xf32>,
    %c30_i32 = arith.constant 30 : i32
    %c1_i32_120 = arith.constant 1 : i32
    %273 = arith.muli %c30_i32, %c1_i32_120 : i32
    %c0_i32_121 = arith.constant 0 : i32
    %274 = arith.addi %c0_i32_121, %273 : i32
    %275 = arith.addi %2, %274 : i32
    %276 = arith.index_cast %275 : i32 to index
    %277 = memref.load %arg2[%276] : memref<64xi32, #tpu.memory_space<smem>>
    %278 = arith.index_cast %277 : i32 to index
    %c0_122 = arith.constant 0 : index
    %279 = vector.load %arg3[%278, %c0_122] : memref<64x128xf32, #tpu.memory_space<vmem>>, vector<1x128xf32>
    %280 = arith.index_cast %274 : i32 to index
    %c0_123 = arith.constant 0 : index
    %281 = vector.load %arg8[%280, %c0_123] : memref<32x128xf32, #tpu.memory_space<vmem>>, vector<1x128xf32>
    tpu.vector_store %arg8[%280, %c0_123], %279 {strides = array<i32>} : memref<32x128xf32, #tpu.memory_space<vmem>>, vector<1x128xf32>,
    %c31_i32 = arith.constant 31 : i32
    %c1_i32_124 = arith.constant 1 : i32
    %282 = arith.muli %c31_i32, %c1_i32_124 : i32
    %c0_i32_125 = arith.constant 0 : i32
    %283 = arith.addi %c0_i32_125, %282 : i32
    %284 = arith.addi %2, %283 : i32
    %285 = arith.index_cast %284 : i32 to index
    %286 = memref.load %arg2[%285] : memref<64xi32, #tpu.memory_space<smem>>
    %287 = arith.index_cast %286 : i32 to index
    %c0_126 = arith.constant 0 : index
    %288 = vector.load %arg3[%287, %c0_126] : memref<64x128xf32, #tpu.memory_space<vmem>>, vector<1x128xf32>
    %289 = arith.index_cast %283 : i32 to index
    %c0_127 = arith.constant 0 : index
    %290 = vector.load %arg8[%289, %c0_127] : memref<32x128xf32, #tpu.memory_space<vmem>>, vector<1x128xf32>
    tpu.vector_store %arg8[%289, %c0_127], %288 {strides = array<i32>} : memref<32x128xf32, #tpu.memory_space<vmem>>, vector<1x128xf32>,
    %c32_i32_128 = arith.constant 32 : i32
    %c32_i32_129 = arith.constant 32 : i32
    %291 = arith.muli %arg1, %c32_i32_129 : i32
    %292 = tpu.assume_multiple %291, 8 : i32
    %293 = arith.index_cast %292 : i32 to index
    %c0_130 = arith.constant 0 : index
    %294 = vector.load %arg4[%293, %c0_130] : memref<32x128xf32, #tpu.memory_space<vmem>>, vector<32x128xf32>
    %c0_131 = arith.constant 0 : index
    %c0_132 = arith.constant 0 : index
    %295 = vector.load %arg8[%c0_131, %c0_132] : memref<32x128xf32, #tpu.memory_space<vmem>>, vector<32x128xf32>
    %296 = arith.addf %295, %294 : vector<32x128xf32>
    %c0_133 = arith.constant 0 : index
    %c0_134 = arith.constant 0 : index
    %297 = vector.load %arg5[%c0_133, %c0_134] : memref<1x128xf32, #tpu.memory_space<vmem>>, vector<1x128xf32>
    %c0_135 = arith.constant 0 : index
    %c0_136 = arith.constant 0 : index
    %298 = vector.load %arg6[%c0_135, %c0_136] : memref<1x128xf32, #tpu.memory_space<vmem>>, vector<1x128xf32>
    %cst = arith.constant dense<0.000000e+00> : vector<32xf32>
    %299 = vector.multi_reduction <add>, %296, %cst [1] : vector<32x128xf32> to vector<32xf32>
    %300 = vector.shape_cast %299 : vector<32xf32> to vector<32x1xf32>
    %cst_137 = arith.constant 1.280000e+02 : f32
    %301 = vector.broadcast %cst_137 : f32 to vector<32x1xf32>
    %302 = arith.divf %300, %301 : vector<32x1xf32>
    %303 = vector.broadcast %302 : vector<32x1xf32> to vector<32x128xf32>
    %304 = arith.subf %296, %303 : vector<32x128xf32>
    %305 = arith.mulf %304, %304 : vector<32x128xf32>
    %cst_138 = arith.constant dense<0.000000e+00> : vector<32xf32>
    %306 = vector.multi_reduction <add>, %305, %cst_138 [1] : vector<32x128xf32> to vector<32xf32>
    %307 = vector.shape_cast %306 : vector<32xf32> to vector<32x1xf32>
    %cst_139 = arith.constant 1.280000e+02 : f32
    %308 = vector.broadcast %cst_139 : f32 to vector<32x1xf32>
    %309 = arith.divf %307, %308 : vector<32x1xf32>
    %cst_140 = arith.constant 9.99999996E-13 : f32
    %310 = vector.broadcast %cst_140 : f32 to vector<32x1xf32>
    %311 = arith.addf %309, %310 : vector<32x1xf32>
    %312 = math.rsqrt %311 : vector<32x1xf32>
    %313 = vector.broadcast %312 : vector<32x1xf32> to vector<32x128xf32>
    %314 = arith.mulf %304, %313 : vector<32x128xf32>
    %315 = vector.broadcast %297 : vector<1x128xf32> to vector<32x128xf32>
    %316 = arith.mulf %314, %315 : vector<32x128xf32>
    %317 = vector.broadcast %298 : vector<1x128xf32> to vector<32x128xf32>
    %318 = arith.addf %316, %317 : vector<32x128xf32>
    %c0_141 = arith.constant 0 : index
    %c0_142 = arith.constant 0 : index
    %c0_143 = arith.constant 0 : index
    %319 = vector.load %arg7[%c0_141, %c0_142, %c0_143] : memref<1x32x128xf32, #tpu.memory_space<vmem>>, vector<1x32x128xf32>
    %320 = vector.shape_cast %319 : vector<1x32x128xf32> to vector<32x128xf32>
    %321 = vector.shape_cast %318 : vector<32x128xf32> to vector<1x32x128xf32>
    tpu.vector_store %arg7[%c0_141, %c0_142, %c0_143], %321 {strides = array<i32>} : memref<1x32x128xf32, #tpu.memory_space<vmem>>, vector<1x32x128xf32>,
    return
  }
  func.func @transform_0(%arg0: i32, %arg1: i32, %arg2: memref<64xi32, #tpu.memory_space<smem>>) -> (i32, i32) {
    %c0_i32 = arith.constant 0 : i32
    %c0_i32_0 = arith.constant 0 : i32
    %c0_i32_1 = arith.constant 0 : i32
    return %c0_i32, %c0_i32_0 : i32, i32
  }
  func.func @transform_1(%arg0: i32, %arg1: i32, %arg2: memref<64xi32, #tpu.memory_space<smem>>) -> (i32, i32) {
    %c0_i32 = arith.constant 0 : i32
    %c0_i32_0 = arith.constant 0 : i32
    %c0_i32_1 = arith.constant 0 : i32
    return %c0_i32, %c0_i32_0 : i32, i32
  }
  func.func @transform_2(%arg0: i32, %arg1: i32, %arg2: memref<64xi32, #tpu.memory_space<smem>>) -> (i32, i32) {
    %c0_i32 = arith.constant 0 : i32
    %c0_i32_0 = arith.constant 0 : i32
    %c0_i32_1 = arith.constant 0 : i32
    return %c0_i32, %c0_i32_0 : i32, i32
  }
  func.func @transform_3(%arg0: i32, %arg1: i32, %arg2: memref<64xi32, #tpu.memory_space<smem>>) -> (i32, i32) {
    %c0_i32 = arith.constant 0 : i32
    %c0_i32_0 = arith.constant 0 : i32
    %c0_i32_1 = arith.constant 0 : i32
    return %c0_i32, %c0_i32_0 : i32, i32
  }
  func.func @transform_4(%arg0: i32, %arg1: i32, %arg2: memref<64xi32, #tpu.memory_space<smem>>) -> (i32, i32, i32) {
    %c0_i32 = arith.constant 0 : i32
    %c0_i32_0 = arith.constant 0 : i32
    return %arg0, %arg1, %c0_i32 : i32, i32, i32
  }
}

</mosaic_0001>

<llo_original>
// kernel: tpu_custom_call.1
$region0: #{tpu_custom_call.1}
  #allocation0 [shape = 'u32[]', space=smem, size = 0x4, offset = 0x4, fixed_abs, tag = 'smem constant byte address 0x4 - core index']
  #allocation1 [shape = 'u32[144,128]{1,0:T(1,128)}', space=vmem, size = 0x12000, scoped, tag = 'internal scratch']
  #allocation2 [shape = 'f32[32,128]{1,0:T(8,128)}', space=vmem, size = 0x4000, scoped, tag = 'scratch operand']
  #allocation3 [shape = 's32[1]{0}', space=sflag, size = 0x4, scoped, tag = 'scoped memory for tpu_custom_call.1']
  #allocation4 [shape = 'u8[512]{0}', space=smem, size = 0x200, scoped, tag = 'prefetched SMEM operand 0']
  %s0 = inlined_call_operand.hbm [shape: s32[64], index: 0, kind: input, shape index: {}]
  %s1 = inlined_call_operand.hbm [shape: f32[64,128], index: 1, kind: input, shape index: {}]
  %s2 = inlined_call_operand.hbm [shape: f32[32,128], index: 2, kind: input, shape index: {}]
  %s3 = inlined_call_operand.vmem [shape: f32[1,128], index: 3, kind: input, shape index: {}]
  %s4 = inlined_call_operand.vmem [shape: f32[1,128], index: 4, kind: input, shape index: {}]
  %s5 = inlined_call_operand.hbm [shape: f32[2,32,128], index: 5, kind: output, shape index: {}]
  %s6 = sld [smem:[#allocation0]]
  $region57: #{tpu_custom_call.1} parent=0
    _
  %s8 = ssub.s32 1, %s6
  %s9 = scalar_select 0, %s8, %s6
  %11 = dma.hbm_to_smem %s0, 16, [#allocation4], [#allocation3]
  %12 = dma.done [#allocation3], 16
  %13 = sfence
  $region1: #{tpu_custom_call.1} parent=0
    #allocation5 [shape = 'u8[32768]{0}', space=vmem, size = 0x8000, scoped, tag = 'input window, operand 1, single buffered']
    #allocation6 [shape = 's32[2]{0}', space=sflag, size = 0x8, scoped, tag = 'scoped memory for tpu_custom_call.1']
    #allocation7 [shape = 's32[2]{0}', space=sflag, size = 0x8, scoped, tag = 'scoped memory for tpu_custom_call.1']
    #allocation8 [shape = 'u8[16384]{0}', space=vmem, size = 0x4000, scoped, tag = 'input window, operand 2, single buffered']
    #allocation9 [shape = 's32[1]{0}', space=sflag, size = 0x4, scoped, tag = 'scoped memory for tpu_custom_call.1']
    #allocation10 [shape = 'u8[32768]{0}', space=vmem, size = 0x8000, scoped, tag = 'output window, operand 0']
    %14 = vsyncpa [#allocation6], 0
    %15 = vsyncpa [#allocation9], 0
    %16 = vsyncpa [#allocation7], 0
    %s17 = scalar_lea.sflag [#allocation7], 1
    %18 = vsyncpa %s17, 0
    loop: start=0, step=1, limit=4
    $region2: #{tpu_custom_call.1} parent=1 // loop_pre_header
      _
    $region3: #{tpu_custom_call.1} parent=1 // loop_header
      %s20 = sphi 0, %s24
      %p21 = scmp.ge.s32.totalorder %s20, 4
      %s27 = sphi 0, %s39
      %s28 = sphi 0, %s35
      %s29 = sphi 0, %s27
      %s30 = sphi 0, %s28
      %s31 = sphi 0, %s29
      %s32 = sphi 0, %s30
      %s40 = sphi 0, %s40
      %s42 = sphi 0, %s40
      %s43 = sphi 0, %s42
      %s57 = sphi 0, %s43
      %s61 = sphi 0, %s61
      %s63 = sphi 0, %s61
      %s64 = sphi 0, %s63
      %s78 = sphi 0, %s64
      %s82 = sphi 0, %s82
      %s84 = sphi 0, %s82
      %s85 = sphi 0, %s84
      %s99 = sphi 0, %s85
      %s103 = sphi 0, %s103
      %s105 = sphi 0, %s103
      %s106 = sphi 0, %s105
      %s120 = sphi 0, %s106
      %s128 = sphi 0, %s130
      %s131 = sphi 0, %s128
      %s132 = sphi 0, %s131
      %s148 = sphi 0, %s132
    $region4: #{tpu_custom_call.1} parent=1 // loop_header_branch
      %23 = sbr.rel (%p21) target = $region8
    $region5: #{tpu_custom_call.1} parent=1 // loop_body
      %s25 = ssub.s32 %s20, 1
      %s26 = ssub.s32 %s20, 2
      %s33 = sadd.s32 1, %s28
      %p34 = scmp.ge.s32.totalorder %s33, 1
      %s35 = scalar_select %p34, 0, %s33
      %s36 = sadd.s32 1, %s27
      %s37 = scalar_select %p34, %s36, %s27
      %p38 = scmp.ge.s32.totalorder %s37, 2
      %s39 = scalar_select %p38, 0, %s37
      %s41 = sadd.s32 %s40, 1
      %p44 = scmp.eq.s32.totalorder %s20, 1
      %p45 = scmp.ne.s32.totalorder %s40, %s42
      %p46 = scmp.eq.s32.totalorder %s20, 0
      %p47 = por %p45, %p46
      %p48 = scmp.ne.s32.totalorder %s40, %s42
      %p49 = scmp.eq.s32.totalorder %s25, 1
      %p50 = por %p48, %p49
      %p51 = scmp.ne.s32.totalorder %s42, %s43
      %p52 = scmp.eq.s32.totalorder %s25, 0
      %p53 = por %p51, %p52
      %p54 = scmp.ne.s32.totalorder %s42, %s43
      %p55 = scmp.eq.s32.totalorder %s26, 1
      %p56 = por %p54, %p55
      %p58 = scmp.ne.s32.totalorder %s43, %s57
      %p59 = scmp.eq.s32.totalorder %s26, 0
      %p60 = por %p58, %p59
      %s62 = sadd.s32 %s61, 1
      %p65 = scmp.eq.s32.totalorder %s20, 1
      %p66 = scmp.ne.s32.totalorder %s61, %s63
      %p67 = scmp.eq.s32.totalorder %s20, 0
      %p68 = por %p66, %p67
      %p69 = scmp.ne.s32.totalorder %s61, %s63
      %p70 = scmp.eq.s32.totalorder %s25, 1
      %p71 = por %p69, %p70
      %p72 = scmp.ne.s32.totalorder %s63, %s64
      %p73 = scmp.eq.s32.totalorder %s25, 0
      %p74 = por %p72, %p73
      %p75 = scmp.ne.s32.totalorder %s63, %s64
      %p76 = scmp.eq.s32.totalorder %s26, 1
      %p77 = por %p75, %p76
      %p79 = scmp.ne.s32.totalorder %s64, %s78
      %p80 = scmp.eq.s32.totalorder %s26, 0
      %p81 = por %p79, %p80
      %s83 = sadd.s32 %s82, 1
      %p86 = scmp.eq.s32.totalorder %s20, 1
      %p87 = scmp.ne.s32.totalorder %s82, %s84
      %p88 = scmp.eq.s32.totalorder %s20, 0
      %p89 = por %p87, %p88
      %p90 = scmp.ne.s32.totalorder %s82, %s84
      %p91 = scmp.eq.s32.totalorder %s25, 1
      %p92 = por %p90, %p91
      %p93 = scmp.ne.s32.totalorder %s84, %s85
      %p94 = scmp.eq.s32.totalorder %s25, 0
      %p95 = por %p93, %p94
      %p96 = scmp.ne.s32.totalorder %s84, %s85
      %p97 = scmp.eq.s32.totalorder %s26, 1
      %p98 = por %p96, %p97
      %p100 = scmp.ne.s32.totalorder %s85, %s99
      %p101 = scmp.eq.s32.totalorder %s26, 0
      %p102 = por %p100, %p101
      %s104 = sadd.s32 %s103, 1
      %p107 = scmp.eq.s32.totalorder %s20, 1
      %p108 = scmp.ne.s32.totalorder %s103, %s105
      %p109 = scmp.eq.s32.totalorder %s20, 0
      %p110 = por %p108, %p109
      %p111 = scmp.ne.s32.totalorder %s103, %s105
      %p112 = scmp.eq.s32.totalorder %s25, 1
      %p113 = por %p111, %p112
      %p114 = scmp.ne.s32.totalorder %s105, %s106
      %p115 = scmp.eq.s32.totalorder %s25, 0
      %p116 = por %p114, %p115
      %p117 = scmp.ne.s32.totalorder %s105, %s106
      %p118 = scmp.eq.s32.totalorder %s26, 1
      %p119 = por %p117, %p118
      %p121 = scmp.ne.s32.totalorder %s106, %s120
      %p122 = scmp.eq.s32.totalorder %s26, 0
      %p123 = por %p121, %p122
      %s124 = ssub.s32 %s27, %s39
      %s125 = ssub.s32 %s28, %s35
      %s126 = sor.u32 %s124, %s125
      %p127 = scmp.eq.s32.totalorder %s126, 0
      %s129 = sadd.s32 %s128, 1
      %s130 = scalar_select %p127, %s128, %s129
      %p133 = pneg %p127
      %p134 = scmp.eq.s32.totalorder %s20, 1
      %p135 = por %p133, %p134
      %p136 = scmp.ne.s32.totalorder %s128, %s131
      %p137 = scmp.eq.s32.totalorder %s20, 0
      %p138 = por %p136, %p137
      %p139 = scmp.ne.s32.totalorder %s128, %s131
      %p140 = scmp.eq.s32.totalorder %s25, 1
      %p141 = por %p139, %p140
      %p142 = scmp.ne.s32.totalorder %s131, %s132
      %p143 = scmp.eq.s32.totalorder %s25, 0
      %p144 = por %p142, %p143
      %p145 = scmp.ne.s32.totalorder %s131, %s132
      %p146 = scmp.eq.s32.totalorder %s26, 1
      %p147 = por %p145, %p146
      %p149 = scmp.ne.s32.totalorder %s132, %s148
      %p150 = scmp.eq.s32.totalorder %s26, 0
      %p151 = por %p149, %p150
      %p152 = scmp.le.s32.totalorder 1, %s20
      %p153 = scmp.lt.s32.totalorder %s20, 3
      %p154 = pnand %p152, %p153
      %p155 = pneg %p154
      // Predicated region
      $region9: #{tpu_custom_call.1} parent=5 // pred_check
        _
      $region10: #{tpu_custom_call.1} parent=5 // pred_check_branch
        %157 = sbr.rel (%p154) target = $region12
      $region11: #{tpu_custom_call.1} parent=5 // pred_region
        %s158 = ssub.s32 %s20, 1
        // Predicated region
        $region13: #{tpu_custom_call.1} parent=11 // pred_check
          %p159 = pneg %p53
        $region14: #{tpu_custom_call.1} parent=11 // pred_check_branch
          %161 = sbr.rel (%p159) target = $region16
        $region15: #{tpu_custom_call.1} parent=11 // pred_region
          %s163 = ssub.s32 1024, 1024
          %164 = vsyncadd [#allocation6], %s163
          %s165 = sshll.u32 [#allocation5], 4
          %s166 = int_to_ptr.vmem [resolvable:$true] %s165
          %171 = dma.hbm_to_vmem [thread:$0]  %s1, 1024, %s166, [#allocation6], 128, 128, 8
        $region16: #{tpu_custom_call.1} parent=11 // pred_fallthru
          _
        // Predicated region
        $region17: #{tpu_custom_call.1} parent=11 // pred_check
          %p172 = pneg %p74
        $region18: #{tpu_custom_call.1} parent=11 // pred_check_branch
          %174 = sbr.rel (%p172) target = $region20
        $region19: #{tpu_custom_call.1} parent=11 // pred_region
          %s176 = ssub.s32 512, 512
          %177 = vsyncadd [#allocation9], %s176
          %s178 = sshll.u32 [#allocation8], 4
          %s179 = int_to_ptr.vmem [resolvable:$true] %s178
          %184 = dma.hbm_to_vmem [thread:$0]  %s2, 512, %s179, [#allocation9], 128, 128, 8
        $region20: #{tpu_custom_call.1} parent=11 // pred_fallthru
          _
        // Predicated region
        $region21: #{tpu_custom_call.1} parent=11 // pred_check
          %p185 = pneg %p95
        $region22: #{tpu_custom_call.1} parent=11 // pred_check_branch
          %187 = sbr.rel (%p185) target = $region24
        $region23: #{tpu_custom_call.1} parent=11 // pred_region
          _
        $region24: #{tpu_custom_call.1} parent=11 // pred_fallthru
          _
        // Predicated region
        $region25: #{tpu_custom_call.1} parent=11 // pred_check
          %p188 = pneg %p116
        $region26: #{tpu_custom_call.1} parent=11 // pred_check_branch
          %190 = sbr.rel (%p188) target = $region28
        $region27: #{tpu_custom_call.1} parent=11 // pred_region
          _
        $region28: #{tpu_custom_call.1} parent=11 // pred_fallthru
          _
      $region12: #{tpu_custom_call.1} parent=5 // pred_fallthru
        _
      %p191 = scmp.lt.s32.totalorder %s20, 2
      // Predicated region
      $region29: #{tpu_custom_call.1} parent=5 // pred_check
        %p192 = pneg %p191
      $region30: #{tpu_custom_call.1} parent=5 // pred_check_branch
        %194 = sbr.rel (%p192) target = $region32
      $region31: #{tpu_custom_call.1} parent=5 // pred_region
        _
      $region32: #{tpu_custom_call.1} parent=5 // pred_fallthru
        _
      %p195 = scmp.le.s32.totalorder 1, %s20
      %p196 = scmp.lt.s32.totalorder %s20, 3
      %p197 = pnand %p195, %p196
      %p198 = pneg %p197
      // Predicated region
      $region33: #{tpu_custom_call.1} parent=5 // pred_check
        _
      $region34: #{tpu_custom_call.1} parent=5 // pred_check_branch
        %200 = sbr.rel (%p197) target = $region36
      $region35: #{tpu_custom_call.1} parent=5 // pred_region
        %s201 = ssub.s32 %s20, 1
        // Predicated region
        $region37: #{tpu_custom_call.1} parent=35 // pred_check
          %p202 = pneg %p53
        $region38: #{tpu_custom_call.1} parent=35 // pred_check_branch
          %204 = sbr.rel (%p202) target = $region40
        $region39: #{tpu_custom_call.1} parent=35 // pred_region
          %205 = dma.done [#allocation6], 1024
        $region40: #{tpu_custom_call.1} parent=35 // pred_fallthru
          _
        // Predicated region
        $region41: #{tpu_custom_call.1} parent=35 // pred_check
          %p206 = pneg %p74
        $region42: #{tpu_custom_call.1} parent=35 // pred_check_branch
          %208 = sbr.rel (%p206) target = $region44
        $region43: #{tpu_custom_call.1} parent=35 // pred_region
          %209 = dma.done [#allocation9], 512
        $region44: #{tpu_custom_call.1} parent=35 // pred_fallthru
          _
        %p210 = pneg %p53
        %p211 = pneg %p50
        %p212 = pneg %p74
        %p213 = pneg %p71
        %p214 = pneg %p95
        %p215 = pneg %p92
        %p216 = pneg %p116
        %p217 = pneg %p113
        %p218 = pneg %p144
        %p219 = pneg %p141
        %s220 = sand.u32 %s131, 1
        %s221 = scalar_lea.sflag [#allocation7], %s220
        %s222 = sand.u32 %s131, 1
        %s223 = smul.addr %s222, 32
        %s224 = scalar_lea.vmem [#allocation10], %s223
        %s225 = smul.u32 4, %s30
        %s226 = sadd.s32 %s29, %s30
        %s227 = smul.u32 %s226, 32
        %s228 = sld [smem:[#allocation4 + %s227]]
        %s229 = scalar_lea.vmem [#allocation5], %s228
        %v230 = vld [vmem:[%s229] sm:$0x1]
        %231 = vst [vmem:[#allocation2] sm:$0x1] %v230
        %s232 = sadd.s32 %s227, 1
        %s233 = sld [smem:[#allocation4 + %s232]]
        %s234 = scalar_lea.vmem [#allocation5], %s233
        %v235 = vld [vmem:[%s234] sm:$0x1]
        %236 = vst [vmem:[#allocation2 + $0x1] sm:$0x1] %v235
        %s237 = sadd.s32 %s227, 2
        %s238 = sld [smem:[#allocation4 + %s237]]
        %s239 = scalar_lea.vmem [#allocation5], %s238
        %v240 = vld [vmem:[%s239] sm:$0x1]
        %241 = vst [vmem:[#allocation2 + $0x2] sm:$0x1] %v240
        %s242 = sadd.s32 %s227, 3
        %s243 = sld [smem:[#allocation4 + %s242]]
        %s244 = scalar_lea.vmem [#allocation5], %s243
        %v245 = vld [vmem:[%s244] sm:$0x1]
        %246 = vst [vmem:[#allocation2 + $0x3] sm:$0x1] %v245
        %s247 = sadd.s32 %s227, 4
        %s248 = sld [smem:[#allocation4 + %s247]]
        %s249 = scalar_lea.vmem [#allocation5], %s248
        %v250 = vld [vmem:[%s249] sm:$0x1]
        %251 = vst [vmem:[#allocation2 + $0x4] sm:$0x1] %v250
        %s252 = sadd.s32 %s227, 5
        %s253 = sld [smem:[#allocation4 + %s252]]
        %s254 = scalar_lea.vmem [#allocation5], %s253
        %v255 = vld [vmem:[%s254] sm:$0x1]
        %256 = vst [vmem:[#allocation2 + $0x5] sm:$0x1] %v255
        %s257 = sadd.s32 %s227, 6
        %s258 = sld [smem:[#allocation4 + %s257]]
        %s259 = scalar_lea.vmem [#allocation5], %s258
        %v260 = vld [vmem:[%s259] sm:$0x1]
        %261 = vst [vmem:[#allocation2 + $0x6] sm:$0x1] %v260
        %s262 = sadd.s32 %s227, 7
        %s263 = sld [smem:[#allocation4 + %s262]]
        %s264 = scalar_lea.vmem [#allocation5], %s263
        %v265 = vld [vmem:[%s264] sm:$0x1]
        %266 = vst [vmem:[#allocation2 + $0x7] sm:$0x1] %v265
        %s267 = sadd.s32 %s227, 8
        %s268 = sld [smem:[#allocation4 + %s267]]
        %s269 = scalar_lea.vmem [#allocation5], %s268
        %v270 = vld [vmem:[%s269] sm:$0x1]
        %271 = vst [vmem:[#allocation2 + $0x8] sm:$0x1] %v270
        %s272 = sadd.s32 %s227, 9
        %s273 = sld [smem:[#allocation4 + %s272]]
        %s274 = scalar_lea.vmem [#allocation5], %s273
        %v275 = vld [vmem:[%s274] sm:$0x1]
        %276 = vst [vmem:[#allocation2 + $0x9] sm:$0x1] %v275
        %s277 = sadd.s32 %s227, 10
        %s278 = sld [smem:[#allocation4 + %s277]]
        %s279 = scalar_lea.vmem [#allocation5], %s278
        %v280 = vld [vmem:[%s279] sm:$0x1]
        %281 = vst [vmem:[#allocation2 + $0xa] sm:$0x1] %v280
        %s282 = sadd.s32 %s227, 11
        %s283 = sld [smem:[#allocation4 + %s282]]
        %s284 = scalar_lea.vmem [#allocation5], %s283
        %v285 = vld [vmem:[%s284] sm:$0x1]
        %286 = vst [vmem:[#allocation2 + $0xb] sm:$0x1] %v285
        %s287 = sadd.s32 %s227, 12
        %s288 = sld [smem:[#allocation4 + %s287]]
        %s289 = scalar_lea.vmem [#allocation5], %s288
        %v290 = vld [vmem:[%s289] sm:$0x1]
        %291 = vst [vmem:[#allocation2 + $0xc] sm:$0x1] %v290
        %s292 = sadd.s32 %s227, 13
        %s293 = sld [smem:[#allocation4 + %s292]]
        %s294 = scalar_lea.vmem [#allocation5], %s293
        %v295 = vld [vmem:[%s294] sm:$0x1]
        %296 = vst [vmem:[#allocation2 + $0xd] sm:$0x1] %v295
        %s297 = sadd.s32 %s227, 14
        %s298 = sld [smem:[#allocation4 + %s297]]
        %s299 = scalar_lea.vmem [#allocation5], %s298
        %v300 = vld [vmem:[%s299] sm:$0x1]
        %301 = vst [vmem:[#allocation2 + $0xe] sm:$0x1] %v300
        %s302 = sadd.s32 %s227, 15
        %s303 = sld [smem:[#allocation4 + %s302]]
        %s304 = scalar_lea.vmem [#allocation5], %s303
        %v305 = vld [vmem:[%s304] sm:$0x1]
        %306 = vst [vmem:[#allocation2 + $0xf] sm:$0x1] %v305
        %s307 = sadd.s32 %s227, 16
        %s308 = sld [smem:[#allocation4 + %s307]]
        %s309 = scalar_lea.vmem [#allocation5], %s308
        %v310 = vld [vmem:[%s309] sm:$0x1]
        %311 = vst [vmem:[#allocation2 + $0x10] sm:$0x1] %v310
        %s312 = sadd.s32 %s227, 17
        %s313 = sld [smem:[#allocation4 + %s312]]
        %s314 = scalar_lea.vmem [#allocation5], %s313
        %v315 = vld [vmem:[%s314] sm:$0x1]
        %316 = vst [vmem:[#allocation2 + $0x11] sm:$0x1] %v315
        %s317 = sadd.s32 %s227, 18
        %s318 = sld [smem:[#allocation4 + %s317]]
        %s319 = scalar_lea.vmem [#allocation5], %s318
        %v320 = vld [vmem:[%s319] sm:$0x1]
        %321 = vst [vmem:[#allocation2 + $0x12] sm:$0x1] %v320
        %s322 = sadd.s32 %s227, 19
        %s323 = sld [smem:[#allocation4 + %s322]]
        %s324 = scalar_lea.vmem [#allocation5], %s323
        %v325 = vld [vmem:[%s324] sm:$0x1]
        %326 = vst [vmem:[#allocation2 + $0x13] sm:$0x1] %v325
        %s327 = sadd.s32 %s227, 20
        %s328 = sld [smem:[#allocation4 + %s327]]
        %s329 = scalar_lea.vmem [#allocation5], %s328
        %v330 = vld [vmem:[%s329] sm:$0x1]
        %331 = vst [vmem:[#allocation2 + $0x14] sm:$0x1] %v330
        %s332 = sadd.s32 %s227, 21
        %s333 = sld [smem:[#allocation4 + %s332]]
        %s334 = scalar_lea.vmem [#allocation5], %s333
        %v335 = vld [vmem:[%s334] sm:$0x1]
        %336 = vst [vmem:[#allocation2 + $0x15] sm:$0x1] %v335
        %s337 = sadd.s32 %s227, 22
        %s338 = sld [smem:[#allocation4 + %s337]]
        %s339 = scalar_lea.vmem [#allocation5], %s338
        %v340 = vld [vmem:[%s339] sm:$0x1]
        %341 = vst [vmem:[#allocation2 + $0x16] sm:$0x1] %v340
        %s342 = sadd.s32 %s227, 23
        %s343 = sld [smem:[#allocation4 + %s342]]
        %s344 = scalar_lea.vmem [#allocation5], %s343
        %v345 = vld [vmem:[%s344] sm:$0x1]
        %346 = vst [vmem:[#allocation2 + $0x17] sm:$0x1] %v345
        %s347 = sadd.s32 %s227, 24
        %s348 = sld [smem:[#allocation4 + %s347]]
        %s349 = scalar_lea.vmem [#allocation5], %s348
        %v350 = vld [vmem:[%s349] sm:$0x1]
        %351 = vst [vmem:[#allocation2 + $0x18] sm:$0x1] %v350
        %s352 = sadd.s32 %s227, 25
        %s353 = sld [smem:[#allocation4 + %s352]]
        %s354 = scalar_lea.vmem [#allocation5], %s353
        %v355 = vld [vmem:[%s354] sm:$0x1]
        %356 = vst [vmem:[#allocation2 + $0x19] sm:$0x1] %v355
        %s357 = sadd.s32 %s227, 26
        %s358 = sld [smem:[#allocation4 + %s357]]
        %s359 = scalar_lea.vmem [#allocation5], %s358
        %v360 = vld [vmem:[%s359] sm:$0x1]
        %361 = vst [vmem:[#allocation2 + $0x1a] sm:$0x1] %v360
        %s362 = sadd.s32 %s227, 27
        %s363 = sld [smem:[#allocation4 + %s362]]
        %s364 = scalar_lea.vmem [#allocation5], %s363
        %v365 = vld [vmem:[%s364] sm:$0x1]
        %366 = vst [vmem:[#allocation2 + $0x1b] sm:$0x1] %v365
        %s367 = sadd.s32 %s227, 28
        %s368 = sld [smem:[#allocation4 + %s367]]
        %s369 = scalar_lea.vmem [#allocation5], %s368
        %v370 = vld [vmem:[%s369] sm:$0x1]
        %371 = vst [vmem:[#allocation2 + $0x1c] sm:$0x1] %v370
        %s372 = sadd.s32 %s227, 29
        %s373 = sld [smem:[#allocation4 + %s372]]
        %s374 = scalar_lea.vmem [#allocation5], %s373
        %v375 = vld [vmem:[%s374] sm:$0x1]
        %376 = vst [vmem:[#allocation2 + $0x1d] sm:$0x1] %v375
        %s377 = sadd.s32 %s227, 30
        %s378 = sld [smem:[#allocation4 + %s377]]
        %s379 = scalar_lea.vmem [#allocation5], %s378
        %v380 = vld [vmem:[%s379] sm:$0x1]
        %381 = vst [vmem:[#allocation2 + $0x1e] sm:$0x1] %v380
        %s382 = sadd.s32 %s227, 31
        %s383 = sld [smem:[#allocation4 + %s382]]
        %s384 = scalar_lea.vmem [#allocation5], %s383
        %v385 = vld [vmem:[%s384] sm:$0x1]
        %386 = vst [vmem:[#allocation2 + $0x1f] sm:$0x1] %v385
        %s387 = smul.u32 %s30, 32
        %s388 = scalar_lea.vmem [#allocation8], %s387
        %v389 = vld [vmem:[%s388] sm:$0xff]
        %v390 = vld [vmem:[%s388 + $0x8] sm:$0xff]
        %v391 = vld [vmem:[%s388 + $0x10] sm:$0xff]
        %v392 = vld [vmem:[%s388 + $0x18] sm:$0xff]
        %v393 = vld [vmem:[#allocation2] sm:$0xff]
        %v394 = vld [vmem:[#allocation2 + $0x8] sm:$0xff]
        %v395 = vld [vmem:[#allocation2 + $0x10] sm:$0xff]
        %v396 = vld [vmem:[#allocation2 + $0x18] sm:$0xff]
        %v397 = vadd.f32 %v393, %v389
        %v398 = vadd.f32 %v394, %v390
        %v399 = vadd.f32 %v395, %v391
        %v400 = vadd.f32 %v396, %v392
        %v401 = vld [vmem:[%s3] sm:$0x1]
        %v402 = vld [vmem:[%s4] sm:$0x1]
        %403 = vadd.xlane.f32.xlu0 %v397
        %v404 = vpop.xlane.xlu0 %403
        %405 = vadd.xlane.f32.xlu0 %v398
        %v406 = vpop.xlane.xlu0 %405
        %407 = vadd.xlane.f32.xlu0 %v399
        %v408 = vpop.xlane.xlu0 %407
        %409 = vadd.xlane.f32.xlu0 %v400
        %v410 = vpop.xlane.xlu0 %409
        %v411 = vrcp.pop 128.0
        %v412 = vmul.f32 %v404, %v411
        %v413 = vmul.f32 %v406, %v411
        %v414 = vmul.f32 %v408, %v411
        %v415 = vmul.f32 %v410, %v411
        %v416 = vsub.f32 %v397, %v412
        %v417 = vsub.f32 %v398, %v413
        %v418 = vsub.f32 %v399, %v414
        %v419 = vsub.f32 %v400, %v415
        %v420 = vmul.f32 %v416, %v416
        %v421 = vmul.f32 %v417, %v417
        %v422 = vmul.f32 %v418, %v418
        %v423 = vmul.f32 %v419, %v419
        %424 = vadd.xlane.f32.xlu0 %v420
        %v425 = vpop.xlane.xlu0 %424
        %426 = vadd.xlane.f32.xlu0 %v421
        %v427 = vpop.xlane.xlu0 %426
        %428 = vadd.xlane.f32.xlu0 %v422
        %v429 = vpop.xlane.xlu0 %428
        %430 = vadd.xlane.f32.xlu0 %v423
        %v431 = vpop.xlane.xlu0 %430
        %v432 = vmul.f32 %v425, %v411
        %v433 = vmul.f32 %v427, %v411
        %v434 = vmul.f32 %v429, %v411
        %v435 = vmul.f32 %v431, %v411
        %v436 = vadd.f32 %v432, 1e-12
        %v437 = vadd.f32 %v433, 1e-12
        %v438 = vadd.f32 %v434, 1e-12
        %v439 = vadd.f32 %v435, 1e-12
        %v440 = vrsqrt.pop %v436
        %v441 = vrsqrt.pop %v437
        %v442 = vrsqrt.pop %v438
        %v443 = vrsqrt.pop %v439
        %v444 = vmul.f32 %v416, %v440
        %v445 = vmul.f32 %v417, %v441
        %v446 = vmul.f32 %v418, %v442
        %v447 = vmul.f32 %v419, %v443
        %v449 = vlaneseq
        %v450 = vshrl.u32 %v449, 7
        %v451 = vsub.s32 0, %v450
        %v452 = vrot.slane %v401, %v451
        %v454 = vmul.f32 %v444, %v452
        %v455 = vmul.f32 %v445, %v452
        %v456 = vmul.f32 %v446, %v452
        %v457 = vmul.f32 %v447, %v452
        %v459 = vlaneseq
        %v460 = vshrl.u32 %v459, 7
        %v461 = vsub.s32 0, %v460
        %v462 = vrot.slane %v402, %v461
        %v464 = vadd.f32 %v454, %v462
        %v465 = vadd.f32 %v455, %v462
        %v466 = vadd.f32 %v456, %v462
        %v467 = vadd.f32 %v457, %v462
        %468 = vst [vmem:[%s224] sm:$0xff] %v464
        %469 = vst [vmem:[%s224 + $0x8] sm:$0xff] %v465
        %470 = vst [vmem:[%s224 + $0x10] sm:$0xff] %v466
        %471 = vst [vmem:[%s224 + $0x18] sm:$0xff] %v467
        %s472 = sand.u32 %s131, 1
        %s473 = scalar_lea.sflag [#allocation7], %s472
        %s474 = sand.u32 %s131, 1
        %s475 = smul.addr %s474, 32
        %s476 = scalar_lea.vmem [#allocation10], %s475
        // Predicated region
        $region45: #{tpu_custom_call.1} parent=35 // pred_check
          %p477 = pneg %p141
        $region46: #{tpu_custom_call.1} parent=35 // pred_check_branch
          %479 = sbr.rel (%p477) target = $region48
        $region47: #{tpu_custom_call.1} parent=35 // pred_region
          %s480 = smul.u32 4, %s30
          %s482 = ssub.s32 512, 512
          %483 = vsyncadd %s473, %s482
          %s484 = smul.addr %s29, 4
          %s485 = sadd.s32 %s480, %s484
          %s486 = smul.addr %s485, 128
          %s487 = scalar_lea.hbm %s5, %s486
          %s488 = sshll.u32 %s476, 4
          %s489 = int_to_ptr.vmem [resolvable:$true] %s488
          %494 = dma.vmem_to_hbm [thread:$0]  %s489, 512, %s487, %s473, 128, 128, 8
        $region48: #{tpu_custom_call.1} parent=35 // pred_fallthru
          _
      $region36: #{tpu_custom_call.1} parent=5 // pred_fallthru
        _
      %p495 = scmp.le.s32.totalorder 2, %s20
      // Predicated region
      $region49: #{tpu_custom_call.1} parent=5 // pred_check
        %p496 = pneg %p495
      $region50: #{tpu_custom_call.1} parent=5 // pred_check_branch
        %498 = sbr.rel (%p496) target = $region52
      $region51: #{tpu_custom_call.1} parent=5 // pred_region
        %s499 = ssub.s32 %s20, 2
        // Predicated region
        $region53: #{tpu_custom_call.1} parent=51 // pred_check
          %p500 = pneg %p147
        $region54: #{tpu_custom_call.1} parent=51 // pred_check_branch
          %502 = sbr.rel (%p500) target = $region56
        $region55: #{tpu_custom_call.1} parent=51 // pred_region
          %s503 = sand.u32 %s132, 1
          %s504 = scalar_lea.sflag [#allocation7], %s503
          %s505 = sand.u32 %s132, 1
          %s506 = smul.addr %s505, 32
          %s507 = scalar_lea.vmem [#allocation10], %s506
          %508 = dma.done %s504, 512
        $region56: #{tpu_custom_call.1} parent=51 // pred_fallthru
          _
      $region52: #{tpu_custom_call.1} parent=5 // pred_fallthru
        _
    $region6: #{tpu_custom_call.1} parent=1 // loop_footer
      %s24 = sadd.s32 1, %s20
    $region7: #{tpu_custom_call.1} parent=1 // loop_footer_branch
      %19 = sbr.rel target = $region3
    $region8: #{tpu_custom_call.1} parent=1 // loop_exit
      _
    %509 = vsyncpa [#allocation6], 1
    %s510 = scalar_lea.sflag [#allocation6], 1
    %511 = vsyncpa %s510, 1
    %512 = vsyncpa [#allocation9], 1
    %513 = vsyncpa [#allocation7], 1
    %s514 = scalar_lea.sflag [#allocation7], 1
    %515 = vsyncpa %s514, 1

</llo_original>
